<compile_context>
chip_gen: v6e
topology: v6e:2x2x1
jax: 0.10.0
libtpu: 0.0.40
codegen_flags: <defaults>
</compile_context>

<pallas_src>
import jax
import jax.numpy as jnp
from jax.experimental import pallas as pl
from jax.experimental.pallas import tpu as pltpu

D_IN, D_H1, D_H2, D_OUT = 5, 10, 12, 4

# ---------------------------------------------------------------------------
# Packed-parameter slab layout (rows x cols of a (96, 16) bf16 array).
# Every tensor starts on a bf16 sublane-tile boundary (row % 16 == 0):
#   rows  0:10  cols 0:5   -> W1^T (10, 5)
#   rows 16:26  col  0     -> b1   (10, 1)
#   rows 32:44  cols 0:10  -> W2^T (12, 10)
#   rows 48:60  col  0     -> b2   (12, 1)
#   rows 64:68  cols 0:12  -> W3^T (4, 12)
#   rows 80:84  col  0     -> b3   (4, 1)
# ---------------------------------------------------------------------------
SLAB_SHAPE = (96, 16)


def _round_up(x, m):
    return (x + m - 1) // m * m


def pack_params(params, dtype=jnp.bfloat16):
    """Pack (w1,b1,w2,b2,w3,b3) -- weights stored (in, out) -- into ONE slab.

    Call once at init; the slab is a constant across forward passes (single
    DMA per kernel launch, resident in VMEM across all grid steps)."""
    w1, b1, w2, b2, w3, b3 = params
    slab = jnp.zeros(SLAB_SHAPE, jnp.float32)
    slab = slab.at[0:10, 0:5].set(w1.T)
    slab = slab.at[16:26, 0].set(b1.reshape(-1))
    slab = slab.at[32:44, 0:10].set(w2.T)
    slab = slab.at[48:60, 0].set(b2.reshape(-1))
    slab = slab.at[64:68, 0:12].set(w3.T)
    slab = slab.at[80:84, 0].set(b3.reshape(-1))
    return slab.astype(dtype)


def fcnet_kernel(x_ref, p_ref, o_ref):
    # Static, sublane-tile-aligned slices of the resident parameter slab.
    w1t = p_ref[0:10, 0:5]                           # (10, 5)  bf16
    b1 = p_ref[16:26, 0:1].astype(jnp.float32)       # (10, 1)
    w2t = p_ref[32:44, 0:10]                         # (12, 10)
    b2 = p_ref[48:60, 0:1].astype(jnp.float32)       # (12, 1)
    w3t = p_ref[64:68, 0:12]                         # (4, 12)
    b3 = p_ref[80:84, 0:1].astype(jnp.float32)       # (4, 1)

    x = x_ref[...]                                   # (5, TB) bf16, batch in lanes

    # fc1 + ReLU   (bf16 operands, f32 MXU accumulate)
    h1 = jnp.maximum(
        jnp.dot(w1t, x, preferred_element_type=jnp.float32) + b1, 0.0)     # (10, TB)
    # fc2 + ReLU
    h2 = jnp.maximum(
        jnp.dot(w2t, h1.astype(jnp.bfloat16),
                preferred_element_type=jnp.float32) + b2, 0.0)             # (12, TB)
    # fc3 (no activation)
    out = jnp.dot(w3t, h2.astype(jnp.bfloat16),
                  preferred_element_type=jnp.float32) + b3                 # (4, TB)
    o_ref[...] = out.astype(o_ref.dtype)


def fcnet_forward(x, slab, *, tb=8192):
    """x: (B, 5) f32, slab: output of pack_params.  Returns (B, 4) f32."""
    B = x.shape[0]

    Bp = _round_up(B, 128)                    # lane alignment only (no TB rounding)
    TB = min(_round_up(tb, 128), Bp)
    if Bp > 128 and TB >= Bp:                 # keep >= 2 grid steps (v7x: 2 TCs)
        TB = max(128, _round_up(Bp // 2, 128))
    grid = pl.cdiv(Bp, TB)                    # partial last block handled by Pallas

    xt = x.T.astype(jnp.bfloat16)             # (5, B): feature-major, batch in lanes
    if Bp != B:
        xt = jnp.pad(xt, ((0, 0), (0, Bp - B)))

    out_t = pl.pallas_call(
        fcnet_kernel,
        out_shape=jax.ShapeDtypeStruct((D_OUT, Bp), jnp.bfloat16),
        grid_spec=pltpu.PrefetchScalarGridSpec(
            num_scalar_prefetch=0,
            grid=(grid,),
            in_specs=[
                # lane-dense activation tile, pipelined across the grid
                pl.BlockSpec((D_IN, TB), lambda i: (0, i)),
                # parameter slab: constant block index -> loaded once, resident
                pl.BlockSpec(SLAB_SHAPE, lambda i: (0, 0)),
            ],
            # lane-dense, unmasked full-width stores
            out_specs=pl.BlockSpec((D_OUT, TB), lambda i: (0, i)),
        ),
        compiler_params=pltpu.CompilerParams(
            dimension_semantics=("parallel",),
            vmem_limit_bytes=32 << 20,
        ),
    )(xt, slab)

    return out_t[:, :B].T.astype(jnp.float32)


def init_params(key):
    """Deterministic init matching nn.Linear shapes (stored as (in, out))."""
    dims = [(D_IN, D_H1), (D_H1, D_H2), (D_H2, D_OUT)]
    params = []
    for i, (fan_in, fan_out) in enumerate(dims):
        kw, kb, key = jax.random.split(jax.random.fold_in(key, i), 3)
        bound = 1.0 / jnp.sqrt(float(fan_in))  # PyTorch-style uniform bound
        w = jax.random.uniform(kw, (fan_in, fan_out), jnp.float32, -bound, bound)
        b = jax.random.uniform(kb, (fan_out,), jnp.float32, -bound, bound)
        params.extend([w, b])
    return tuple(params)


def reference_forward(x, params):
    """Pure-JAX reference with the SAME bf16-operand / f32-accumulate /
    bf16-output scheme the kernel uses (apples-to-apples comparison)."""
    w1, b1, w2, b2, w3, b3 = params
    bf = lambda a: a.astype(jnp.bfloat16).astype(jnp.float32)
    h = bf(x)
    h = jax.nn.relu(h @ bf(w1) + bf(b1))
    h = jax.nn.relu(bf(h) @ bf(w2) + bf(b2))
    out = bf(h) @ bf(w3) + bf(b3)
    return bf(out)  # kernel emits bf16


if __name__ == "__main__":
    key = jax.random.PRNGKey(0)
    k_x, k_p = jax.random.split(key)

    params = init_params(k_p)
    slab = pack_params(params)          # packed ONCE, reused across forwards

    # B=8: tiny single-tile path.  B=300: multi-step grid + partial last block.
    for B in (8, 300):
        x = jax.random.normal(jax.random.fold_in(k_x, B), (B, D_IN), jnp.float32)
        out = jax.block_until_ready(fcnet_forward(x, slab))
        ref = reference_forward(x, params)
        assert out.shape == (B, D_OUT), out.shape
        assert jnp.allclose(out, ref, atol=1e-2, rtol=1e-2), \
            f"mismatch vs reference at B={B}"

    print("KERNEL_OK")
</pallas_src>

<mosaic_0001>
module attributes {stable_mosaic.version = 11 : i64} {
  func.func @fcnet_kernel(%arg0: i32, %arg1: memref<5x128xbf16, #tpu.memory_space<vmem>>, %arg2: memref<96x16xbf16, #tpu.memory_space<vmem>>, %arg3: memref<4x128xbf16, #tpu.memory_space<vmem>>) attributes {dimension_semantics = [#tpu.dimension_semantics<parallel>], iteration_bounds = array<i64: 1>, scalar_prefetch = 0 : i64, scratch_operands = 0 : i64, tpu.core_type = #tpu.core_type<tc>, window_params = [{transform_indices = @transform_0, window_bounds = array<i64: 5, 128>}, {pipeline_mode = #tpu.pipeline_mode<synchronous>, transform_indices = @transform_1, window_bounds = array<i64: 96, 16>}, {transform_indices = @transform_2, window_bounds = array<i64: 4, 128>}]} {
    %c0 = arith.constant 0 : index
    %c0_0 = arith.constant 0 : index
    %0 = vector.load %arg2[%c0, %c0_0] : memref<96x16xbf16, #tpu.memory_space<vmem>>, vector<10x5xbf16>
    %c16 = arith.constant 16 : index
    %c0_1 = arith.constant 0 : index
    %1 = vector.load %arg2[%c16, %c0_1] : memref<96x16xbf16, #tpu.memory_space<vmem>>, vector<10x1xbf16>
    %2 = arith.extf %1 : vector<10x1xbf16> to vector<10x1xf32>
    %c32 = arith.constant 32 : index
    %c0_2 = arith.constant 0 : index
    %3 = vector.load %arg2[%c32, %c0_2] : memref<96x16xbf16, #tpu.memory_space<vmem>>, vector<12x10xbf16>
    %c48 = arith.constant 48 : index
    %c0_3 = arith.constant 0 : index
    %4 = vector.load %arg2[%c48, %c0_3] : memref<96x16xbf16, #tpu.memory_space<vmem>>, vector<12x1xbf16>
    %5 = arith.extf %4 : vector<12x1xbf16> to vector<12x1xf32>
    %c64 = arith.constant 64 : index
    %c0_4 = arith.constant 0 : index
    %6 = vector.load %arg2[%c64, %c0_4] : memref<96x16xbf16, #tpu.memory_space<vmem>>, vector<4x12xbf16>
    %c80 = arith.constant 80 : index
    %c0_5 = arith.constant 0 : index
    %7 = vector.load %arg2[%c80, %c0_5] : memref<96x16xbf16, #tpu.memory_space<vmem>>, vector<4x1xbf16>
    %8 = arith.extf %7 : vector<4x1xbf16> to vector<4x1xf32>
    %c0_6 = arith.constant 0 : index
    %c0_7 = arith.constant 0 : index
    %9 = vector.load %arg1[%c0_6, %c0_7] : memref<5x128xbf16, #tpu.memory_space<vmem>>, vector<5x128xbf16>
    %cst = arith.constant dense<0.000000e+00> : vector<10x128xf32>
    %10 = tpu.matmul %0, %9, %cst {dimension_numbers = #tpu.dot_dimension_numbers<[1], [0], [0], [1], [0, 0, 1, 1], [], []>} : vector<10x5xbf16>, vector<5x128xbf16>, vector<10x128xf32> -> vector<10x128xf32>
    %11 = vector.broadcast %2 : vector<10x1xf32> to vector<10x128xf32>
    %12 = arith.addf %10, %11 : vector<10x128xf32>
    %cst_8 = arith.constant 0.000000e+00 : f32
    %13 = vector.broadcast %cst_8 : f32 to vector<10x128xf32>
    %14 = arith.maximumf %12, %13 : vector<10x128xf32>
    %15 = arith.truncf %14 : vector<10x128xf32> to vector<10x128xbf16>
    %cst_9 = arith.constant dense<0.000000e+00> : vector<12x128xf32>
    %16 = tpu.matmul %3, %15, %cst_9 {dimension_numbers = #tpu.dot_dimension_numbers<[1], [0], [0], [1], [0, 0, 1, 1], [], []>} : vector<12x10xbf16>, vector<10x128xbf16>, vector<12x128xf32> -> vector<12x128xf32>
    %17 = vector.broadcast %5 : vector<12x1xf32> to vector<12x128xf32>
    %18 = arith.addf %16, %17 : vector<12x128xf32>
    %cst_10 = arith.constant 0.000000e+00 : f32
    %19 = vector.broadcast %cst_10 : f32 to vector<12x128xf32>
    %20 = arith.maximumf %18, %19 : vector<12x128xf32>
    %21 = arith.truncf %20 : vector<12x128xf32> to vector<12x128xbf16>
    %cst_11 = arith.constant dense<0.000000e+00> : vector<4x128xf32>
    %22 = tpu.matmul %6, %21, %cst_11 {dimension_numbers = #tpu.dot_dimension_numbers<[1], [0], [0], [1], [0, 0, 1, 1], [], []>} : vector<4x12xbf16>, vector<12x128xbf16>, vector<4x128xf32> -> vector<4x128xf32>
    %23 = vector.broadcast %8 : vector<4x1xf32> to vector<4x128xf32>
    %24 = arith.addf %22, %23 : vector<4x128xf32>
    %25 = arith.truncf %24 : vector<4x128xf32> to vector<4x128xbf16>
    %c0_12 = arith.constant 0 : index
    %c0_13 = arith.constant 0 : index
    %26 = vector.load %arg3[%c0_12, %c0_13] : memref<4x128xbf16, #tpu.memory_space<vmem>>, vector<4x128xbf16>
    tpu.vector_store %arg3[%c0_12, %c0_13], %25 {strides = array<i32>} : memref<4x128xbf16, #tpu.memory_space<vmem>>, vector<4x128xbf16>,
    return
  }
  func.func @transform_0(%arg0: i32) -> (i32, i32) {
    %c0_i32 = arith.constant 0 : i32
    %c0_i32_0 = arith.constant 0 : i32
    return %c0_i32, %arg0 : i32, i32
  }
  func.func @transform_1(%arg0: i32) -> (i32, i32) {
    %c0_i32 = arith.constant 0 : i32
    %c0_i32_0 = arith.constant 0 : i32
    %c0_i32_1 = arith.constant 0 : i32
    return %c0_i32, %c0_i32_0 : i32, i32
  }
  func.func @transform_2(%arg0: i32) -> (i32, i32) {
    %c0_i32 = arith.constant 0 : i32
    %c0_i32_0 = arith.constant 0 : i32
    return %c0_i32, %arg0 : i32, i32
  }
}

</mosaic_0001>

<llo_original>
// kernel: tpu_custom_call.1
$region0: #{tpu_custom_call.1}
  #allocation0 [shape = 'u32[]', space=smem, size = 0x4, offset = 0x4, fixed_abs, tag = 'smem constant byte address 0x4 - core index']
  #allocation1 [shape = 'u32[144,128]{1,0:T(1,128)}', space=vmem, size = 0x12000, scoped, tag = 'internal scratch']
  %s0 = inlined_call_operand.vmem [shape: bf16[5,128], index: 0, kind: input, shape index: {}]
  %s1 = inlined_call_operand.vmem [shape: bf16[96,16], index: 1, kind: input, shape index: {}]
  %s2 = inlined_call_operand.hbm [shape: bf16[4,128], index: 2, kind: output, shape index: {}]
  %s3 = sld [smem:[#allocation0]]
  $region18: #{tpu_custom_call.1} parent=0
    _
  %s5 = ssub.s32 1, %s3
  %s6 = scalar_select 0, %s5, %s3
  $region1: #{tpu_custom_call.1} parent=0
    #allocation2 [shape = 'u8[1024]{0}', space=vmem, size = 0x400, scoped, tag = 'output window, operand 0, single buffered']
    #allocation3 [shape = 's32[1]{0}', space=sflag, size = 0x4, scoped, tag = 'scoped memory for tpu_custom_call.1']
    %7 = vsyncpa [#allocation3], 0
    // Predicated region
    $region2: #{tpu_custom_call.1} parent=1 // pred_check
      _
    $region3: #{tpu_custom_call.1} parent=1 // pred_check_branch
      %9 = sbr.rel (0) target = $region5
    $region4: #{tpu_custom_call.1} parent=1 // pred_region
      _
    $region5: #{tpu_custom_call.1} parent=1 // pred_fallthru
      _
    // Predicated region
    $region6: #{tpu_custom_call.1} parent=1 // pred_check
      _
    $region7: #{tpu_custom_call.1} parent=1 // pred_check_branch
      %11 = sbr.rel (0) target = $region9
    $region8: #{tpu_custom_call.1} parent=1 // pred_region
      _
    $region9: #{tpu_custom_call.1} parent=1 // pred_fallthru
      _
    %v13 = vld [vmem:[%s1] sm:$0xf]
    %v14 = vld [vmem:[%s1 + $0x4] sm:$0x1]
    %v15 = vld [vmem:[%s1 + $0x8] sm:$0xf]
    %v16 = vld [vmem:[%s1 + $0xc] sm:$0x1]
    %v17 = vunpack.c.l.bf16 %v15
    %v18 = vunpack.c.l.bf16 %v16
    %v19 = vld [vmem:[%s1 + $0x10] sm:$0xf]
    %v20 = vld [vmem:[%s1 + $0x14] sm:$0x3]
    %v21 = vld [vmem:[%s1 + $0x18] sm:$0xf]
    %v22 = vld [vmem:[%s1 + $0x1c] sm:$0x3]
    %v23 = vunpack.c.l.bf16 %v21
    %v24 = vunpack.c.l.bf16 %v22
    %v25 = vld [vmem:[%s1 + $0x20] sm:$0x3]
    %v26 = vld [vmem:[%s1 + $0x28] sm:$0x3]
    %v27 = vunpack.c.l.bf16 %v26
    %v28 = vld [vmem:[%s0] sm:$0x7]
    %30 = vset.pattern.permute.xlu0 0
    %31 = vperm.xlu0 %30, %v17
    %v32 = vpop.permute.xlu0 %31
    %35 = vset.pattern.permute.xlu0 0
    %36 = vperm.xlu0 %35, %v18
    %v37 = vpop.permute.xlu0 %36
    %v41 = vunpack.c.l.b16 %v13
    %v42 = vunpack.c.l.b16 %v14
    %v43 = vpack.c.b16 %v42, %v41
    %vm44 = vcmask 39936
    %v46 = vsel %vm44, %v43, 0
    %vm48 = vcmask 1041408
    %vm49 = vcmask 1042432
    %v50 = vsel %vm48, 4294967295, 65535
    %v51 = vsel %vm49, %v50, 0
    %v53 = vand.u32 %v28, %v51
    %55 = vmatprep.subr.bf16.mxu0 0
    %56 = vmatpush1.bf16.msra.mxu0 0
    %57 = vmatprep.subr.bf16.mxu0 0
    %58 = vmatpush1.bf16.msra.mxu0 0
    %59 = vmatprep.subr.bf16.mxu0 0
    %60 = vmatpush1.bf16.msra.mxu0 0
    %61 = vmatprep.subr.bf16.mxu0 0
    %62 = vmatpush1.bf16.msra.mxu0 0
    %63 = vmatprep.subr.bf16.mxu0 0
    %64 = vmatpush1.bf16.msra.mxu0 0
    %65 = vmatprep.subr.bf16.mxu0 0
    %66 = vmatpush1.bf16.msra.mxu0 0
    %67 = vmatprep.subr.bf16.mxu0 0
    %68 = vmatpush1.bf16.msra.mxu0 0
    %69 = vmatprep.subr.bf16.mxu0 0
    %70 = vmatpush1.bf16.msra.mxu0 %v53
    %71 = vmatprep.subr.bf16.mxu0 0
    %72 = vmatpush2.bf16.msra.mxu0 0
    %73 = vmatprep.subr.bf16.mxu0 0
    %74 = vmatpush2.bf16.msra.mxu0 0
    %75 = vmatprep.subr.bf16.mxu0 0
    %76 = vmatpush2.bf16.msra.mxu0 0
    %77 = vmatprep.subr.bf16.mxu0 0
    %78 = vmatpush2.bf16.msra.mxu0 0
    %79 = vmatprep.subr.bf16.mxu0 0
    %80 = vmatpush2.bf16.msra.mxu0 0
    %81 = vmatprep.subr.bf16.mxu0 0
    %82 = vmatpush2.bf16.msra.mxu0 0
    %83 = vmatprep.subr.bf16.mxu0 0
    %84 = vmatpush2.bf16.msra.mxu0 0
    %85 = vmatprep.subr.bf16.mxu0 0
    %86 = vmatpush2.bf16.msra.mxu0 0
    %87 = vmatprep.mubr.bf16.mxu0 0
    %88 = vmatmul.mubr.bf16.gmra.mxu0 %v46
    %v89 = vpop.f32.mrf.mxu0
    %v90 = vadd.f32 %v32, %v89
    %v91 = vpop.f32.mrf.mxu0
    %v92 = vpop.f32.mrf.mxu0
    %v93 = vadd.f32 %v37, %v92
    %v94 = vpop.f32.mrf.mxu0
    %95 = vdwg.mxu0
    %v96 = vmax.f32 %v90, 0.0
    %v97 = vmax.f32 %v93, 0.0
    %v98 = vpack.c.bf16 %v97, %v96
    %100 = vset.pattern.permute.xlu0 0
    %101 = vperm.xlu0 %100, %v23
    %v102 = vpop.permute.xlu0 %101
    %105 = vset.pattern.permute.xlu0 0
    %106 = vperm.xlu0 %105, %v24
    %v107 = vpop.permute.xlu0 %106
    %v111 = vunpack.c.l.b16 %v19
    %v112 = vunpack.c.l.b16 %v20
    %v113 = vpack.c.b16 %v112, %v111
    %vm114 = vcmask 80896
    %v116 = vsel %vm114, %v113, 0
    %vm118 = vcmask 1044480
    %v120 = vsel %vm118, %v98, 0
    %122 = vmatprep.subr.bf16.mxu0 0
    %123 = vmatpush1.bf16.msra.mxu0 0
    %124 = vmatprep.subr.bf16.mxu0 0
    %125 = vmatpush1.bf16.msra.mxu0 0
    %126 = vmatprep.subr.bf16.mxu0 0
    %127 = vmatpush1.bf16.msra.mxu0 0
    %128 = vmatprep.subr.bf16.mxu0 0
    %129 = vmatpush1.bf16.msra.mxu0 0
    %130 = vmatprep.subr.bf16.mxu0 0
    %131 = vmatpush1.bf16.msra.mxu0 0
    %132 = vmatprep.subr.bf16.mxu0 0
    %133 = vmatpush1.bf16.msra.mxu0 0
    %134 = vmatprep.subr.bf16.mxu0 0
    %135 = vmatpush1.bf16.msra.mxu0 0
    %136 = vmatprep.subr.bf16.mxu0 0
    %137 = vmatpush1.bf16.msra.mxu0 %v120
    %138 = vmatprep.subr.bf16.mxu0 0
    %139 = vmatpush2.bf16.msra.mxu0 0
    %140 = vmatprep.subr.bf16.mxu0 0
    %141 = vmatpush2.bf16.msra.mxu0 0
    %142 = vmatprep.subr.bf16.mxu0 0
    %143 = vmatpush2.bf16.msra.mxu0 0
    %144 = vmatprep.subr.bf16.mxu0 0
    %145 = vmatpush2.bf16.msra.mxu0 0
    %146 = vmatprep.subr.bf16.mxu0 0
    %147 = vmatpush2.bf16.msra.mxu0 0
    %148 = vmatprep.subr.bf16.mxu0 0
    %149 = vmatpush2.bf16.msra.mxu0 0
    %150 = vmatprep.subr.bf16.mxu0 0
    %151 = vmatpush2.bf16.msra.mxu0 0
    %152 = vmatprep.subr.bf16.mxu0 0
    %153 = vmatpush2.bf16.msra.mxu0 0
    %154 = vmatprep.mubr.bf16.mxu0 0
    %155 = vmatmul.mubr.bf16.gmra.mxu0 %v116
    %v156 = vpop.f32.mrf.mxu0
    %v157 = vadd.f32 %v102, %v156
    %v158 = vpop.f32.mrf.mxu0
    %v159 = vpop.f32.mrf.mxu0
    %v160 = vadd.f32 %v107, %v159
    %v161 = vpop.f32.mrf.mxu0
    %162 = vdwg.mxu0
    %v163 = vmax.f32 %v157, 0.0
    %v164 = vmax.f32 %v160, 0.0
    %v165 = vpack.c.bf16 %v164, %v163
    %167 = vset.pattern.permute.xlu0 0
    %168 = vperm.xlu0 %167, %v27
    %v169 = vpop.permute.xlu0 %168
    %vm171 = vcmask 97280
    %v173 = vsel %vm171, %v25, 0
    %vm175 = vcmask 1045504
    %v177 = vsel %vm175, %v165, 0
    %179 = vmatprep.subr.bf16.mxu0 0
    %180 = vmatpush1.bf16.msra.mxu0 0
    %181 = vmatprep.subr.bf16.mxu0 0
    %182 = vmatpush1.bf16.msra.mxu0 0
    %183 = vmatprep.subr.bf16.mxu0 0
    %184 = vmatpush1.bf16.msra.mxu0 0
    %185 = vmatprep.subr.bf16.mxu0 0
    %186 = vmatpush1.bf16.msra.mxu0 0
    %187 = vmatprep.subr.bf16.mxu0 0
    %188 = vmatpush1.bf16.msra.mxu0 0
    %189 = vmatprep.subr.bf16.mxu0 0
    %190 = vmatpush1.bf16.msra.mxu0 0
    %191 = vmatprep.subr.bf16.mxu0 0
    %192 = vmatpush1.bf16.msra.mxu0 0
    %193 = vmatprep.subr.bf16.mxu0 0
    %194 = vmatpush1.bf16.msra.mxu0 %v177
    %195 = vmatprep.subr.bf16.mxu0 0
    %196 = vmatpush2.bf16.msra.mxu0 0
    %197 = vmatprep.subr.bf16.mxu0 0
    %198 = vmatpush2.bf16.msra.mxu0 0
    %199 = vmatprep.subr.bf16.mxu0 0
    %200 = vmatpush2.bf16.msra.mxu0 0
    %201 = vmatprep.subr.bf16.mxu0 0
    %202 = vmatpush2.bf16.msra.mxu0 0
    %203 = vmatprep.subr.bf16.mxu0 0
    %204 = vmatpush2.bf16.msra.mxu0 0
    %205 = vmatprep.subr.bf16.mxu0 0
    %206 = vmatpush2.bf16.msra.mxu0 0
    %207 = vmatprep.subr.bf16.mxu0 0
    %208 = vmatpush2.bf16.msra.mxu0 0
    %209 = vmatprep.subr.bf16.mxu0 0
    %210 = vmatpush2.bf16.msra.mxu0 0
    %211 = vmatprep.mubr.bf16.mxu0 0
    %212 = vmatmul.mubr.bf16.gmra.mxu0 %v173
    %v213 = vpop.f32.mrf.mxu0
    %v214 = vadd.f32 %v169, %v213
    %v215 = vpop.f32.mrf.mxu0
    %v216 = vpop.f32.mrf.mxu0
    %v217 = vpop.f32.mrf.mxu0
    %218 = vdwg.mxu0
    %v219 = vpack.c.bf16 %v214, %v214
    %220 = vst [vmem:[#allocation2] sm:$0x3] %v219
    // Predicated region
    $region10: #{tpu_custom_call.1} parent=1 // pred_check
      _
    $region11: #{tpu_custom_call.1} parent=1 // pred_check_branch
      %222 = sbr.rel (0) target = $region13
    $region12: #{tpu_custom_call.1} parent=1 // pred_region
      %s224 = ssub.s32 32, 32
      %225 = vsyncadd [#allocation3], %s224
      %s227 = sshll.u32 [#allocation2], 4
      %s228 = int_to_ptr.vmem [resolvable:$true] %s227
      %230 = dma.vmem_to_hbm [thread:$0]  %s228, 32, %s2, [#allocation3]
    $region13: #{tpu_custom_call.1} parent=1 // pred_fallthru
      _
    // Predicated region
    $region14: #{tpu_custom_call.1} parent=1 // pred_check
      _
    $region15: #{tpu_custom_call.1} parent=1 // pred_check_branch
      %232 = sbr.rel (0) target = $region17
    $region16: #{tpu_custom_call.1} parent=1 // pred_region
      %233 = dma.done [#allocation3], 32
    $region17: #{tpu_custom_call.1} parent=1 // pred_fallthru
      _
    %234 = vsyncpa [#allocation3], 1

</llo_original>
